<compile_context>
chip_gen: v7x
topology: tpu7x:2x2x1
jax: 0.10.0
libtpu: 0.0.40
codegen_flags: <defaults>
</compile_context>

<pallas_src>
import functools

import jax
import jax.numpy as jnp
from jax.experimental import pallas as pl
from jax.experimental.pallas import tpu as pltpu


def _round_up(x, m):
    return (x + m - 1) // m * m


# ----------------------------------------------------------------------------
# Pallas kernel: fused layer contraction + activation epilogue
#   grid = (row_tiles [parallel], k_tiles [arbitrary])
# ----------------------------------------------------------------------------
def rgcn_layer_kernel(lhs_ref, rhs_ref, out_ref, acc_ref, *,
                      c_out_valid, apply_relu, apply_log_softmax):
    @pl.when(pl.program_id(1) == 0)
    def _():
        acc_ref[...] = jnp.zeros_like(acc_ref)

    # Single MXU contraction per (row tile, K tile); f32 accumulation in VMEM scratch.
    acc_ref[...] += jnp.dot(lhs_ref[...], rhs_ref[...],
                            preferred_element_type=jnp.float32)

    @pl.when(pl.program_id(1) == pl.num_programs(1) - 1)
    def _():
        out = acc_ref[...]
        if apply_relu:
            out = jnp.maximum(out, 0.0)
        if apply_log_softmax:
            # Padded class lanes must not participate in the reduction.
            col = jax.lax.broadcasted_iota(jnp.int32, out.shape, 1)
            out = jnp.where(col < c_out_valid, out, -jnp.inf)
            m = jnp.max(out, axis=-1, keepdims=True)
            s = out - m
            out = s - jnp.log(jnp.sum(jnp.exp(s), axis=-1, keepdims=True))
        out_ref[...] = out


def rgcn_conv(x_src, x_tgt, A, W_rel, W_root, b_root, onehot, *,
              apply_relu, apply_log_softmax):
    R, n_tgt, n_src = A.shape
    C_in = x_src.shape[1]
    C_out = W_rel.shape[2]
    T = W_root.shape[0]

    # ---- hoisted, grid-invariant precompute (plain XLA, once per layer) ----
    # Relation message stack: (R*n_src, C_out), row index = r*n_src + s.
    msg_stack = jnp.einsum("si,rio->rso", x_src, W_rel).reshape(R * n_src, C_out)
    # Per-node-type masked replicas of x_tgt: (n_tgt, T*C_in).
    x_tgt_masked = (onehot[:, :, None] * x_tgt[:, None, :]).reshape(n_tgt, T * C_in)
    W_root_stack = W_root.reshape(T * C_in, C_out)
    # Fold the relation sum into the contraction dim (column index = r*n_src + s).
    A_fold = jnp.transpose(A, (1, 0, 2)).reshape(n_tgt, R * n_src)
    # TODO(synk): for real ogbn-mag batches replace the dense zero-heavy A_fold stream
    # with a scalar-prefetch gather / segment-sum formulation (and/or int8/fp8 A).

    # Whole layer == one contraction:
    #   [A_fold | x_tgt_masked | onehot] @ [msg_stack ; W_root_stack ; b_root]
    lhs = jnp.concatenate([A_fold, x_tgt_masked, onehot], axis=1)
    rhs = jnp.concatenate([msg_stack, W_root_stack, b_root], axis=0)
    K = lhs.shape[1]

    # ---- padding / tiling ----
    C_out_p = _round_up(C_out, 128)                    # lane-dense output (unmasked vst)
    tile_m = min(256, _round_up(n_tgt, 8))             # grow toward HBM roofline on v6e/v5e
    tile_k = min(2048, _round_up(K, 128))              # K-tiling keeps VMEM bounded on v7x
    n_tgt_p = _round_up(n_tgt, tile_m)
    K_p = _round_up(K, tile_k)

    lhs = jnp.pad(lhs, ((0, n_tgt_p - n_tgt), (0, K_p - K))).astype(jnp.bfloat16)
    rhs = jnp.pad(rhs, ((0, K_p - K), (0, C_out_p - C_out))).astype(jnp.bfloat16)

    kernel = functools.partial(
        rgcn_layer_kernel, c_out_valid=C_out,
        apply_relu=apply_relu, apply_log_softmax=apply_log_softmax)

    out = pl.pallas_call(
        kernel,
        out_shape=jax.ShapeDtypeStruct((n_tgt_p, C_out_p), jnp.float32),
        grid_spec=pltpu.PrefetchScalarGridSpec(
            num_scalar_prefetch=0,
            grid=(n_tgt_p // tile_m, K_p // tile_k),
            in_specs=[
                pl.BlockSpec((tile_m, tile_k), lambda i, k: (i, k)),     # lhs row/K tile
                pl.BlockSpec((tile_k, C_out_p), lambda i, k: (k, 0)),    # rhs K tile
            ],
            out_specs=pl.BlockSpec((tile_m, C_out_p), lambda i, k: (i, 0)),
            scratch_shapes=[pltpu.VMEM((tile_m, C_out_p), jnp.float32)],
        ),
        compiler_params=pltpu.CompilerParams(
            dimension_semantics=("parallel", "arbitrary"),
            vmem_limit_bytes=64 * 1024 * 1024),
    )(lhs, rhs)
    return out[:n_tgt, :C_out]


# ----------------------------------------------------------------------------
# Plain-JAX glue (graph bookkeeping, parameter setup)
# ----------------------------------------------------------------------------
def build_mean_adj(edge_index, edge_type, num_rel, n_tgt, n_src):
    """Dense per-relation mean-normalized adjacency == PyG scatter-mean aggr."""
    src, tgt = edge_index[0], edge_index[1]
    counts = jnp.zeros((num_rel, n_tgt, n_src), jnp.float32)
    counts = counts.at[edge_type, tgt, src].add(1.0)
    deg = counts.sum(axis=-1, keepdims=True)
    return jnp.where(deg > 0, counts / jnp.where(deg > 0, deg, 1.0), 0.0)


def group_input(feat_tables, node_type, local_node_idx, n_id, in_channels):
    """RGCN.group_input: assemble features per node type (raw feats + emb_dict)."""
    nt = node_type[n_id]
    li = local_node_idx[n_id]
    h = jnp.zeros((n_id.shape[0], in_channels), jnp.float32)
    for key, table in feat_tables.items():
        gathered = jnp.take(table, jnp.clip(li, 0, table.shape[0] - 1), axis=0)
        h = jnp.where((nt == key)[:, None], gathered, h)
    return h


def rgcn_forward(params, n_id, feat_tables, adjs, edge_types_per_layer,
                 node_type, local_node_idx, in_channels, num_edge_types,
                 num_node_types):
    x = group_input(feat_tables, node_type, local_node_idx, n_id, in_channels)
    nt = node_type[n_id]
    num_layers = len(adjs)
    for i, (edge_index, size) in enumerate(adjs):
        n_src, n_tgt = size
        x_tgt = x[:n_tgt]
        tgt_nt = nt[:n_tgt]
        A = build_mean_adj(edge_index, edge_types_per_layer[i],
                           num_edge_types, n_tgt, n_src)
        onehot = jax.nn.one_hot(tgt_nt, num_node_types, dtype=jnp.float32)
        last = (i == num_layers - 1)
        x = rgcn_conv(x, x_tgt, A,
                      params["W_rel"][i], params["W_root"][i], params["b_root"][i],
                      onehot, apply_relu=not last, apply_log_softmax=last)
        # TODO(synk): F.dropout(p=0.5) skipped -- eval-mode (identity) semantics.
        nt = tgt_nt
    return x


def rgcn_forward_ref(params, n_id, feat_tables, adjs, edge_types_per_layer,
                     node_type, local_node_idx, in_channels, num_edge_types,
                     num_node_types):
    """Pure-JAX f32 reference with identical math (for verification)."""
    x = group_input(feat_tables, node_type, local_node_idx, n_id, in_channels)
    nt = node_type[n_id]
    num_layers = len(adjs)
    for i, (edge_index, size) in enumerate(adjs):
        n_src, n_tgt = size
        x_tgt = x[:n_tgt]
        tgt_nt = nt[:n_tgt]
        A = build_mean_adj(edge_index, edge_types_per_layer[i],
                           num_edge_types, n_tgt, n_src)
        onehot = jax.nn.one_hot(tgt_nt, num_node_types, dtype=jnp.float32)
        out = jnp.einsum("rts,si,rio->to", A, x, params["W_rel"][i])
        out = out + jnp.einsum("nt,ni,tio->no", onehot, x_tgt, params["W_root"][i])
        out = out + onehot @ params["b_root"][i]
        if i != num_layers - 1:
            out = jax.nn.relu(out)
        else:
            out = jax.nn.log_softmax(out, axis=-1)
        x, nt = out, tgt_nt
    return x


def glorot(key, shape):
    fan_in, fan_out = shape[-2], shape[-1]
    limit = (6.0 / (fan_in + fan_out)) ** 0.5
    return jax.random.uniform(key, shape, jnp.float32, -limit, limit)


# ----------------------------------------------------------------------------
# Main: synthetic small graph, deterministic params
# ----------------------------------------------------------------------------
if __name__ == "__main__":
    key = jax.random.PRNGKey(0)

    # model dims (small, consistent with the module's constructor)
    I, H, O = 32, 32, 16          # in_channels, hidden_channels, out_channels
    num_layers = 2
    T = 3                          # num_node_types (e.g. paper / author / institution)
    R = 4                          # num_edge_types
    num_nodes_dict = {0: 40, 1: 30, 2: 30}   # type 0 has raw features, 1 & 2 use emb_dict
    N_total = sum(num_nodes_dict.values())

    # global node bookkeeping (group_hetero_graph analog)
    node_type = jnp.concatenate(
        [jnp.full((num_nodes_dict[t],), t, jnp.int32) for t in range(T)])
    local_node_idx = jnp.concatenate(
        [jnp.arange(num_nodes_dict[t], dtype=jnp.int32) for t in range(T)])

    # feature / embedding tables (x_dict + emb_dict), deterministic init
    key, k0, k1, k2 = jax.random.split(key, 4)
    feat_tables = {
        0: jax.random.normal(k0, (num_nodes_dict[0], I), jnp.float32),
        1: glorot(k1, (num_nodes_dict[1], I)),   # xavier_uniform emb
        2: glorot(k2, (num_nodes_dict[2], I)),
    }

    # layer weights: rel_lins (no bias) + root_lins (bias), stored as (C_in, C_out)
    layer_dims = [(I, H), (H, O)]
    params = {"W_rel": [], "W_root": [], "b_root": []}
    for (ci, co) in layer_dims:
        key, kr, kw, kb = jax.random.split(key, 4)
        params["W_rel"].append(glorot(kr, (R, ci, co)))
        params["W_root"].append(glorot(kw, (T, ci, co)))
        bb = 1.0 / (ci ** 0.5)
        params["b_root"].append(jax.random.uniform(kb, (T, co), jnp.float32, -bb, bb))

    # sampled subgraph: n_id (64 nodes), two bipartite adjs (NeighborSampler style)
    key, kn = jax.random.split(key)
    n_id = jax.random.permutation(kn, N_total)[:64].astype(jnp.int32)

    sizes = [(64, 32), (32, 16)]   # (n_src, n_tgt) per layer
    n_edges = [192, 96]
    adjs, edge_types_per_layer = [], []
    for l, ((n_src, n_tgt), E) in enumerate(zip(sizes, n_edges)):
        key, ks, kt, ke = jax.random.split(key, 4)
        src = jax.random.randint(ks, (E,), 0, n_src, jnp.int32)
        tgt = jax.random.randint(kt, (E,), 0, n_tgt, jnp.int32)
        etype = jax.random.randint(ke, (E,), 0, R, jnp.int32)
        adjs.append((jnp.stack([src, tgt]), (n_src, n_tgt)))
        edge_types_per_layer.append(etype)

    out = rgcn_forward(params, n_id, feat_tables, adjs, edge_types_per_layer,
                       node_type, local_node_idx, I, R, T)
    out = jax.block_until_ready(out)

    ref = rgcn_forward_ref(params, n_id, feat_tables, adjs, edge_types_per_layer,
                           node_type, local_node_idx, I, R, T)
    ref = jax.block_until_ready(ref)

    assert out.shape == (16, O)
    assert bool(jnp.all(jnp.isfinite(out)))
    # bf16 MXU inputs with f32 accumulation vs. a pure-f32 reference.
    assert bool(jnp.max(jnp.abs(out - ref)) < 5e-2), "kernel/reference mismatch"

    print("KERNEL_OK")
</pallas_src>

<mosaic_0001>
module attributes {stable_mosaic.version = 11 : i64} {
  func.func @rgcn_layer_kernel(%arg0: i32, %arg1: i32, %arg2: memref<32x384xbf16, #tpu.memory_space<vmem>>, %arg3: memref<384x128xbf16, #tpu.memory_space<vmem>>, %arg4: memref<32x128xf32, #tpu.memory_space<vmem>>, %arg5: memref<32x128xf32, #tpu.memory_space<vmem>>) attributes {dimension_semantics = [#tpu.dimension_semantics<parallel>, #tpu.dimension_semantics<arbitrary>], iteration_bounds = array<i64: 1, 1>, scalar_prefetch = 0 : i64, scratch_operands = 1 : i64, tpu.core_type = #tpu.core_type<tc>, window_params = [{transform_indices = @transform_0, window_bounds = array<i64: 32, 384>}, {transform_indices = @transform_1, window_bounds = array<i64: 384, 128>}, {transform_indices = @transform_2, window_bounds = array<i64: 32, 128>}]} {
    %c0_i32 = arith.constant 0 : i32
    %0 = arith.cmpi eq, %arg1, %c0_i32 : i32
    %1 = arith.extui %0 : i1 to i32
    %c0_i32_0 = arith.constant 0 : i32
    %2 = arith.cmpi ne, %1, %c0_i32_0 : i32
    scf.if %2 {
      %cst_10 = arith.constant 0.000000e+00 : f32
      %12 = vector.broadcast %cst_10 : f32 to vector<32x128xf32>
      %c0_11 = arith.constant 0 : index
      %c0_12 = arith.constant 0 : index
      %13 = vector.load %arg5[%c0_11, %c0_12] : memref<32x128xf32, #tpu.memory_space<vmem>>, vector<32x128xf32>
      tpu.vector_store %arg5[%c0_11, %c0_12], %12 {strides = array<i32>} : memref<32x128xf32, #tpu.memory_space<vmem>>, vector<32x128xf32>,
    } else {
    }
    %c0 = arith.constant 0 : index
    %c0_1 = arith.constant 0 : index
    %3 = vector.load %arg5[%c0, %c0_1] : memref<32x128xf32, #tpu.memory_space<vmem>>, vector<32x128xf32>
    %c0_2 = arith.constant 0 : index
    %c0_3 = arith.constant 0 : index
    %4 = vector.load %arg2[%c0_2, %c0_3] : memref<32x384xbf16, #tpu.memory_space<vmem>>, vector<32x384xbf16>
    %c0_4 = arith.constant 0 : index
    %c0_5 = arith.constant 0 : index
    %5 = vector.load %arg3[%c0_4, %c0_5] : memref<384x128xbf16, #tpu.memory_space<vmem>>, vector<384x128xbf16>
    %cst = arith.constant dense<0.000000e+00> : vector<32x128xf32>
    %6 = tpu.matmul %4, %5, %cst {dimension_numbers = #tpu.dot_dimension_numbers<[1], [0], [0], [1], [0, 0, 1, 1], [], []>} : vector<32x384xbf16>, vector<384x128xbf16>, vector<32x128xf32> -> vector<32x128xf32>
    %7 = arith.addf %3, %6 : vector<32x128xf32>
    %c0_6 = arith.constant 0 : index
    %c0_7 = arith.constant 0 : index
    %8 = vector.load %arg5[%c0_6, %c0_7] : memref<32x128xf32, #tpu.memory_space<vmem>>, vector<32x128xf32>
    tpu.vector_store %arg5[%c0_6, %c0_7], %7 {strides = array<i32>} : memref<32x128xf32, #tpu.memory_space<vmem>>, vector<32x128xf32>,
    %c0_i32_8 = arith.constant 0 : i32
    %9 = arith.cmpi eq, %arg1, %c0_i32_8 : i32
    %10 = arith.extui %9 : i1 to i32
    %c0_i32_9 = arith.constant 0 : i32
    %11 = arith.cmpi ne, %10, %c0_i32_9 : i32
    scf.if %11 {
      %c0_10 = arith.constant 0 : index
      %c0_11 = arith.constant 0 : index
      %12 = vector.load %arg5[%c0_10, %c0_11] : memref<32x128xf32, #tpu.memory_space<vmem>>, vector<32x128xf32>
      %cst_12 = arith.constant 0.000000e+00 : f32
      %13 = vector.broadcast %cst_12 : f32 to vector<32x128xf32>
      %14 = arith.maximumf %12, %13 : vector<32x128xf32>
      %c0_13 = arith.constant 0 : index
      %c0_14 = arith.constant 0 : index
      %15 = vector.load %arg4[%c0_13, %c0_14] : memref<32x128xf32, #tpu.memory_space<vmem>>, vector<32x128xf32>
      tpu.vector_store %arg4[%c0_13, %c0_14], %14 {strides = array<i32>} : memref<32x128xf32, #tpu.memory_space<vmem>>, vector<32x128xf32>,
    } else {
    }
    return
  }
  func.func @transform_0(%arg0: i32, %arg1: i32) -> (i32, i32) {
    %c0_i32 = arith.constant 0 : i32
    return %arg0, %arg1 : i32, i32
  }
  func.func @transform_1(%arg0: i32, %arg1: i32) -> (i32, i32) {
    %c0_i32 = arith.constant 0 : i32
    %c0_i32_0 = arith.constant 0 : i32
    return %arg1, %c0_i32 : i32, i32
  }
  func.func @transform_2(%arg0: i32, %arg1: i32) -> (i32, i32) {
    %c0_i32 = arith.constant 0 : i32
    %c0_i32_0 = arith.constant 0 : i32
    return %arg0, %c0_i32 : i32, i32
  }
}

</mosaic_0001>

<llo_original>
// kernel: tpu_custom_call.1
$region0: #{tpu_custom_call.1}
  #allocation0 [shape = 'u32[]', space=smem, size = 0x4, offset = 0x4, fixed_abs, tag = 'smem constant byte address 0x4 - core index']
  #allocation1 [shape = 'u32[144,128]{1,0:T(1,128)}', space=vmem, size = 0x12000, scoped, tag = 'internal scratch']
  #allocation2 [shape = 'f32[32,128]{1,0:T(8,128)}', space=vmem, size = 0x4000, scoped, tag = 'scratch operand']
  %s0 = inlined_call_operand.hbm [shape: bf16[32,384], index: 0, kind: input, shape index: {}]
  %s1 = inlined_call_operand.hbm [shape: bf16[384,128], index: 1, kind: input, shape index: {}]
  %s2 = inlined_call_operand.hbm [shape: f32[32,128], index: 2, kind: output, shape index: {}]
  %s3 = sld [smem:[#allocation0]]
  $region34: #{tpu_custom_call.1} parent=0
    _
  %s5 = ssub.s32 1, %s3
  %s6 = scalar_select 0, %s5, %s3
  $region1: #{tpu_custom_call.1} parent=0
    #allocation3 [shape = 'u8[24576]{0}', space=vmem, size = 0x6000, scoped, tag = 'input window, operand 0, single buffered']
    #allocation4 [shape = 's32[1]{0}', space=sflag, size = 0x4, scoped, tag = 'scoped memory for tpu_custom_call.1']
    #allocation5 [shape = 's32[1]{0}', space=sflag, size = 0x4, scoped, tag = 'scoped memory for tpu_custom_call.1']
    #allocation6 [shape = 'u8[98304]{0}', space=vmem, size = 0x18000, scoped, tag = 'input window, operand 1, single buffered']
    #allocation7 [shape = 's32[1]{0}', space=sflag, size = 0x4, scoped, tag = 'scoped memory for tpu_custom_call.1']
    #allocation8 [shape = 'u8[16384]{0}', space=vmem, size = 0x4000, scoped, tag = 'output window, operand 0, single buffered']
    %7 = vsyncpa [#allocation4], 0
    %8 = vsyncpa [#allocation7], 0
    %9 = vsyncpa [#allocation5], 0
    // Predicated region
    $region2: #{tpu_custom_call.1} parent=1 // pred_check
      _
    $region3: #{tpu_custom_call.1} parent=1 // pred_check_branch
      %11 = sbr.rel (0) target = $region5
    $region4: #{tpu_custom_call.1} parent=1 // pred_region
      %s13 = ssub.s32 768, 768
      %14 = vsyncadd [#allocation4], %s13
      %s15 = sshll.u32 [#allocation3], 4
      %s16 = int_to_ptr.vmem [resolvable:$true] %s15
      %21 = dma.hbm_to_vmem [thread:$0]  %s0, 768, %s16, [#allocation4], 192, 192, 12
    $region5: #{tpu_custom_call.1} parent=1 // pred_fallthru
      _
    // Predicated region
    $region6: #{tpu_custom_call.1} parent=1 // pred_check
      _
    $region7: #{tpu_custom_call.1} parent=1 // pred_check_branch
      %23 = sbr.rel (0) target = $region9
    $region8: #{tpu_custom_call.1} parent=1 // pred_region
      %s25 = ssub.s32 3072, 3072
      %26 = vsyncadd [#allocation7], %s25
      %s27 = sshll.u32 [#allocation6], 4
      %s28 = int_to_ptr.vmem [resolvable:$true] %s27
      %33 = dma.hbm_to_vmem [thread:$0]  %s1, 3072, %s28, [#allocation7], 64, 64, 4
    $region9: #{tpu_custom_call.1} parent=1 // pred_fallthru
      _
    // Predicated region
    $region10: #{tpu_custom_call.1} parent=1 // pred_check
      _
    $region11: #{tpu_custom_call.1} parent=1 // pred_check_branch
      %35 = sbr.rel (0) target = $region13
    $region12: #{tpu_custom_call.1} parent=1 // pred_region
      %36 = dma.done [#allocation4], 768
    $region13: #{tpu_custom_call.1} parent=1 // pred_fallthru
      _
    // Predicated region
    $region14: #{tpu_custom_call.1} parent=1 // pred_check
      _
    $region15: #{tpu_custom_call.1} parent=1 // pred_check_branch
      %38 = sbr.rel (0) target = $region17
    $region16: #{tpu_custom_call.1} parent=1 // pred_region
      %39 = dma.done [#allocation7], 3072
    $region17: #{tpu_custom_call.1} parent=1 // pred_fallthru
      _
    %p41 = scmp.eq.s32.totalorder 0, 0
    // Predicated region
    $region18: #{tpu_custom_call.1} parent=1 // pred_check
      %p42 = pneg %p41
    $region19: #{tpu_custom_call.1} parent=1 // pred_check_branch
      %44 = sbr.rel (%p42) target = $region21
    $region20: #{tpu_custom_call.1} parent=1 // pred_region
      %45 = vst [vmem:[#allocation2] sm:$0xff] 0.0
      %46 = vst [vmem:[#allocation2 + $0x8] sm:$0xff] 0.0
      %47 = vst [vmem:[#allocation2 + $0x10] sm:$0xff] 0.0
      %48 = vst [vmem:[#allocation2 + $0x18] sm:$0xff] 0.0
    $region21: #{tpu_custom_call.1} parent=1 // pred_fallthru
      _
    %v49 = vld [vmem:[#allocation2] sm:$0xff]
    %v50 = vld [vmem:[#allocation2 + $0x8] sm:$0xff]
    %v51 = vld [vmem:[#allocation2 + $0x10] sm:$0xff]
    %v52 = vld [vmem:[#allocation2 + $0x18] sm:$0xff]
    %v53 = vld [vmem:[#allocation3] sm:$0xff]
    %v54 = vld [vmem:[#allocation3 + $0x8] sm:$0xf]
    %v55 = vld [vmem:[#allocation3 + $0xc] sm:$0xff]
    %v56 = vld [vmem:[#allocation3 + $0x14] sm:$0xf]
    %v57 = vld [vmem:[#allocation3 + $0x18] sm:$0xff]
    %v58 = vld [vmem:[#allocation3 + $0x20] sm:$0xf]
    %v59 = vld [vmem:[#allocation3 + $0x24] sm:$0xff]
    %v60 = vld [vmem:[#allocation3 + $0x2c] sm:$0xf]
    %v61 = vld [vmem:[#allocation6] sm:$0xf]
    %v62 = vld [vmem:[#allocation6 + $0x4] sm:$0xf]
    %v63 = vld [vmem:[#allocation6 + $0x8] sm:$0xf]
    %v64 = vld [vmem:[#allocation6 + $0xc] sm:$0xf]
    %v65 = vld [vmem:[#allocation6 + $0x10] sm:$0xf]
    %v66 = vld [vmem:[#allocation6 + $0x14] sm:$0xf]
    %v67 = vld [vmem:[#allocation6 + $0x18] sm:$0xf]
    %v68 = vld [vmem:[#allocation6 + $0x1c] sm:$0xf]
    %v69 = vld [vmem:[#allocation6 + $0x20] sm:$0xf]
    %v70 = vld [vmem:[#allocation6 + $0x24] sm:$0xf]
    %v71 = vld [vmem:[#allocation6 + $0x28] sm:$0xf]
    %v72 = vld [vmem:[#allocation6 + $0x2c] sm:$0xf]
    %v73 = vld [vmem:[#allocation6 + $0x30] sm:$0xf]
    %v74 = vld [vmem:[#allocation6 + $0x34] sm:$0xf]
    %v75 = vld [vmem:[#allocation6 + $0x38] sm:$0xf]
    %v76 = vld [vmem:[#allocation6 + $0x3c] sm:$0xf]
    %v77 = vld [vmem:[#allocation6 + $0x40] sm:$0xf]
    %v78 = vld [vmem:[#allocation6 + $0x44] sm:$0xf]
    %v79 = vld [vmem:[#allocation6 + $0x48] sm:$0xf]
    %v80 = vld [vmem:[#allocation6 + $0x4c] sm:$0xf]
    %v81 = vld [vmem:[#allocation6 + $0x50] sm:$0xf]
    %v82 = vld [vmem:[#allocation6 + $0x54] sm:$0xf]
    %v83 = vld [vmem:[#allocation6 + $0x58] sm:$0xf]
    %v84 = vld [vmem:[#allocation6 + $0x5c] sm:$0xf]
    %v85 = vld [vmem:[#allocation6 + $0x60] sm:$0xf]
    %v86 = vld [vmem:[#allocation6 + $0x64] sm:$0xf]
    %v87 = vld [vmem:[#allocation6 + $0x68] sm:$0xf]
    %v88 = vld [vmem:[#allocation6 + $0x6c] sm:$0xf]
    %v89 = vld [vmem:[#allocation6 + $0x70] sm:$0xf]
    %v90 = vld [vmem:[#allocation6 + $0x74] sm:$0xf]
    %v91 = vld [vmem:[#allocation6 + $0x78] sm:$0xf]
    %v92 = vld [vmem:[#allocation6 + $0x7c] sm:$0xf]
    %v93 = vld [vmem:[#allocation6 + $0x80] sm:$0xf]
    %v94 = vld [vmem:[#allocation6 + $0x84] sm:$0xf]
    %v95 = vld [vmem:[#allocation6 + $0x88] sm:$0xf]
    %v96 = vld [vmem:[#allocation6 + $0x8c] sm:$0xf]
    %v97 = vld [vmem:[#allocation6 + $0x90] sm:$0xf]
    %v98 = vld [vmem:[#allocation6 + $0x94] sm:$0xf]
    %v99 = vld [vmem:[#allocation6 + $0x98] sm:$0xf]
    %v100 = vld [vmem:[#allocation6 + $0x9c] sm:$0xf]
    %v101 = vld [vmem:[#allocation6 + $0xa0] sm:$0xf]
    %v102 = vld [vmem:[#allocation6 + $0xa4] sm:$0xf]
    %v103 = vld [vmem:[#allocation6 + $0xa8] sm:$0xf]
    %v104 = vld [vmem:[#allocation6 + $0xac] sm:$0xf]
    %v105 = vld [vmem:[#allocation6 + $0xb0] sm:$0xf]
    %v106 = vld [vmem:[#allocation6 + $0xb4] sm:$0xf]
    %v107 = vld [vmem:[#allocation6 + $0xb8] sm:$0xf]
    %v108 = vld [vmem:[#allocation6 + $0xbc] sm:$0xf]
    %v117 = vunpack.c.l.b16 %v53
    %v118 = vunpack.c.h.b16 %v53
    %v119 = vunpack.c.l.b16 %v54
    %v120 = vunpack.c.l.b16 %v55
    %v121 = vunpack.c.h.b16 %v55
    %v122 = vunpack.c.l.b16 %v56
    %v123 = vunpack.c.l.b16 %v57
    %v124 = vunpack.c.h.b16 %v57
    %v125 = vunpack.c.l.b16 %v58
    %v126 = vunpack.c.l.b16 %v59
    %v127 = vunpack.c.h.b16 %v59
    %v128 = vunpack.c.l.b16 %v60
    %v129 = vpack.c.b16 %v120, %v117
    %v130 = vpack.c.b16 %v121, %v118
    %v131 = vpack.c.b16 %v122, %v119
    %v132 = vpack.c.b16 %v126, %v123
    %v133 = vpack.c.b16 %v127, %v124
    %v134 = vpack.c.b16 %v128, %v125
    %v189 = vunpack.c.l.b16 %v61
    %v190 = vunpack.c.l.b16 %v62
    %v191 = vunpack.c.l.b16 %v63
    %v192 = vunpack.c.l.b16 %v64
    %v193 = vunpack.c.l.b16 %v65
    %v194 = vunpack.c.l.b16 %v66
    %v195 = vunpack.c.l.b16 %v67
    %v196 = vunpack.c.l.b16 %v68
    %v197 = vunpack.c.l.b16 %v69
    %v198 = vunpack.c.l.b16 %v70
    %v199 = vunpack.c.l.b16 %v71
    %v200 = vunpack.c.l.b16 %v72
    %v201 = vunpack.c.l.b16 %v73
    %v202 = vunpack.c.l.b16 %v74
    %v203 = vunpack.c.l.b16 %v75
    %v204 = vunpack.c.l.b16 %v76
    %v205 = vunpack.c.l.b16 %v77
    %v206 = vunpack.c.l.b16 %v78
    %v207 = vunpack.c.l.b16 %v79
    %v208 = vunpack.c.l.b16 %v80
    %v209 = vunpack.c.l.b16 %v81
    %v210 = vunpack.c.l.b16 %v82
    %v211 = vunpack.c.l.b16 %v83
    %v212 = vunpack.c.l.b16 %v84
    %v213 = vunpack.c.l.b16 %v85
    %v214 = vunpack.c.l.b16 %v86
    %v215 = vunpack.c.l.b16 %v87
    %v216 = vunpack.c.l.b16 %v88
    %v217 = vunpack.c.l.b16 %v89
    %v218 = vunpack.c.l.b16 %v90
    %v219 = vunpack.c.l.b16 %v91
    %v220 = vunpack.c.l.b16 %v92
    %v221 = vunpack.c.l.b16 %v93
    %v222 = vunpack.c.l.b16 %v94
    %v223 = vunpack.c.l.b16 %v95
    %v224 = vunpack.c.l.b16 %v96
    %v225 = vunpack.c.l.b16 %v97
    %v226 = vunpack.c.l.b16 %v98
    %v227 = vunpack.c.l.b16 %v99
    %v228 = vunpack.c.l.b16 %v100
    %v229 = vunpack.c.l.b16 %v101
    %v230 = vunpack.c.l.b16 %v102
    %v231 = vunpack.c.l.b16 %v103
    %v232 = vunpack.c.l.b16 %v104
    %v233 = vunpack.c.l.b16 %v105
    %v234 = vunpack.c.l.b16 %v106
    %v235 = vunpack.c.l.b16 %v107
    %v236 = vunpack.c.l.b16 %v108
    %v237 = vpack.c.b16 %v190, %v189
    %v238 = vpack.c.b16 %v192, %v191
    %v239 = vpack.c.b16 %v194, %v193
    %v240 = vpack.c.b16 %v196, %v195
    %v241 = vpack.c.b16 %v198, %v197
    %v242 = vpack.c.b16 %v200, %v199
    %v243 = vpack.c.b16 %v202, %v201
    %v244 = vpack.c.b16 %v204, %v203
    %v245 = vpack.c.b16 %v206, %v205
    %v246 = vpack.c.b16 %v208, %v207
    %v247 = vpack.c.b16 %v210, %v209
    %v248 = vpack.c.b16 %v212, %v211
    %v249 = vpack.c.b16 %v214, %v213
    %v250 = vpack.c.b16 %v216, %v215
    %v251 = vpack.c.b16 %v218, %v217
    %v252 = vpack.c.b16 %v220, %v219
    %v253 = vpack.c.b16 %v222, %v221
    %v254 = vpack.c.b16 %v224, %v223
    %v255 = vpack.c.b16 %v226, %v225
    %v256 = vpack.c.b16 %v228, %v227
    %v257 = vpack.c.b16 %v230, %v229
    %v258 = vpack.c.b16 %v232, %v231
    %v259 = vpack.c.b16 %v234, %v233
    %v260 = vpack.c.b16 %v236, %v235
    %285 = vmatprep.subr.bf16.mxu0 0
    %286 = vmatpush1.bf16.msra.mxu0 %v237
    %287 = vmatprep.subr.bf16.mxu0 0
    %288 = vmatpush1.bf16.msra.mxu0 %v238
    %289 = vmatprep.subr.bf16.mxu0 0
    %290 = vmatpush1.bf16.msra.mxu0 %v239
    %291 = vmatprep.subr.bf16.mxu0 0
    %292 = vmatpush1.bf16.msra.mxu0 %v240
    %293 = vmatprep.subr.bf16.mxu0 0
    %294 = vmatpush1.bf16.msra.mxu0 %v241
    %295 = vmatprep.subr.bf16.mxu0 0
    %296 = vmatpush1.bf16.msra.mxu0 %v242
    %297 = vmatprep.subr.bf16.mxu0 0
    %298 = vmatpush1.bf16.msra.mxu0 %v243
    %299 = vmatprep.subr.bf16.mxu0 0
    %300 = vmatpush1.bf16.msra.mxu0 %v244
    %301 = vmatprep.subr.bf16.mxu0 0
    %302 = vmatpush1.bf16.msra.mxu0 %v245
    %303 = vmatprep.subr.bf16.mxu0 0
    %304 = vmatpush1.bf16.msra.mxu0 %v246
    %305 = vmatprep.subr.bf16.mxu0 0
    %306 = vmatpush1.bf16.msra.mxu0 %v247
    %307 = vmatprep.subr.bf16.mxu0 0
    %308 = vmatpush1.bf16.msra.mxu0 %v248
    %309 = vmatprep.subr.bf16.mxu0 0
    %310 = vmatpush1.bf16.msra.mxu0 %v249
    %311 = vmatprep.subr.bf16.mxu0 0
    %312 = vmatpush1.bf16.msra.mxu0 %v250
    %313 = vmatprep.subr.bf16.mxu0 0
    %314 = vmatpush1.bf16.msra.mxu0 %v251
    %315 = vmatprep.subr.bf16.mxu0 0
    %316 = vmatpush1.bf16.msra.mxu0 %v252
    %317 = vmatprep.mubr.bf16.mxu0 %v130
    %318 = vmatmul.mubr.bf16.gmra.mrb[0].mxu0 %v129
    %v319 = vpop.f32.mrb[0].mxu0
    %v320 = vadd.f32 0.0, %v319
    %v321 = vpop.f32.mrb[0].mxu0
    %v322 = vpop.f32.mrb[0].mxu0
    %v323 = vadd.f32 0.0, %v322
    %v324 = vpop.f32.mrb[0].mxu0
    %325 = vmatprep.mubr.bf16.mxu0 %v133
    %326 = vmatmul.mubr.bf16.gmra.mrb[0].mxu0 %v132
    %v327 = vpop.f32.mrb[0].mxu0
    %v328 = vadd.f32 0.0, %v327
    %v329 = vpop.f32.mrb[0].mxu0
    %v330 = vpop.f32.mrb[0].mxu0
    %v331 = vadd.f32 0.0, %v330
    %v332 = vpop.f32.mrb[0].mxu0
    %333 = vdwg.mxu0
    %334 = vmatprep.subr.bf16.mxu0 0
    %335 = vmatpush1.bf16.msra.mxu0 %v253
    %336 = vmatprep.subr.bf16.mxu0 0
    %337 = vmatpush1.bf16.msra.mxu0 %v254
    %338 = vmatprep.subr.bf16.mxu0 0
    %339 = vmatpush1.bf16.msra.mxu0 %v255
    %340 = vmatprep.subr.bf16.mxu0 0
    %341 = vmatpush1.bf16.msra.mxu0 %v256
    %342 = vmatprep.subr.bf16.mxu0 0
    %343 = vmatpush1.bf16.msra.mxu0 %v257
    %344 = vmatprep.subr.bf16.mxu0 0
    %345 = vmatpush1.bf16.msra.mxu0 %v258
    %346 = vmatprep.subr.bf16.mxu0 0
    %347 = vmatpush1.bf16.msra.mxu0 %v259
    %348 = vmatprep.subr.bf16.mxu0 0
    %349 = vmatpush1.bf16.msra.mxu0 %v260
    %350 = vmatprep.subr.bf16.mxu0 0
    %351 = vmatpush1.bf16.msra.mxu0 0
    %352 = vmatprep.subr.bf16.mxu0 0
    %353 = vmatpush1.bf16.msra.mxu0 0
    %354 = vmatprep.subr.bf16.mxu0 0
    %355 = vmatpush1.bf16.msra.mxu0 0
    %356 = vmatprep.subr.bf16.mxu0 0
    %357 = vmatpush1.bf16.msra.mxu0 0
    %358 = vmatprep.subr.bf16.mxu0 0
    %359 = vmatpush1.bf16.msra.mxu0 0
    %360 = vmatprep.subr.bf16.mxu0 0
    %361 = vmatpush1.bf16.msra.mxu0 0
    %362 = vmatprep.subr.bf16.mxu0 0
    %363 = vmatpush1.bf16.msra.mxu0 0
    %364 = vmatprep.subr.bf16.mxu0 0
    %365 = vmatpush1.bf16.msra.mxu0 0
    %366 = vmatprep.mubr.bf16.mxu0 0
    %367 = vmatmul.mubr.bf16.gmra.mrb[0].mxu0 %v131
    %v368 = vpop.f32.mrb[0].mxu0
    %v369 = vadd.f32 %v320, %v368
    %v370 = vpop.f32.mrb[0].mxu0
    %v371 = vpop.f32.mrb[0].mxu0
    %v372 = vadd.f32 %v323, %v371
    %v373 = vpop.f32.mrb[0].mxu0
    %374 = vmatprep.mubr.bf16.mxu0 0
    %375 = vmatmul.mubr.bf16.gmra.mrb[0].mxu0 %v134
    %v376 = vpop.f32.mrb[0].mxu0
    %v377 = vadd.f32 %v328, %v376
    %v378 = vpop.f32.mrb[0].mxu0
    %v379 = vpop.f32.mrb[0].mxu0
    %v380 = vadd.f32 %v331, %v379
    %v381 = vpop.f32.mrb[0].mxu0
    %382 = vdwg.mxu0
    %v383 = vadd.f32 %v49, %v369
    %v384 = vadd.f32 %v50, %v372
    %v385 = vadd.f32 %v51, %v377
    %v386 = vadd.f32 %v52, %v380
    %387 = vst [vmem:[#allocation2] sm:$0xff] %v383
    %388 = vst [vmem:[#allocation2 + $0x8] sm:$0xff] %v384
    %389 = vst [vmem:[#allocation2 + $0x10] sm:$0xff] %v385
    %390 = vst [vmem:[#allocation2 + $0x18] sm:$0xff] %v386
    // Predicated region
    $region22: #{tpu_custom_call.1} parent=1 // pred_check
      %p391 = pneg %p41
    $region23: #{tpu_custom_call.1} parent=1 // pred_check_branch
      %393 = sbr.rel (%p391) target = $region25
    $region24: #{tpu_custom_call.1} parent=1 // pred_region
      %v394 = vld [vmem:[#allocation2] sm:$0xff]
      %v395 = vld [vmem:[#allocation2 + $0x8] sm:$0xff]
      %v396 = vld [vmem:[#allocation2 + $0x10] sm:$0xff]
      %v397 = vld [vmem:[#allocation2 + $0x18] sm:$0xff]
      %v398 = vmax.f32 %v394, 0.0
      %v399 = vmax.f32 %v395, 0.0
      %v400 = vmax.f32 %v396, 0.0
      %v401 = vmax.f32 %v397, 0.0
      %402 = vst [vmem:[#allocation8] sm:$0xff] %v398
      %403 = vst [vmem:[#allocation8 + $0x8] sm:$0xff] %v399
      %404 = vst [vmem:[#allocation8 + $0x10] sm:$0xff] %v400
      %405 = vst [vmem:[#allocation8 + $0x18] sm:$0xff] %v401
    $region25: #{tpu_custom_call.1} parent=1 // pred_fallthru
      _
    // Predicated region
    $region26: #{tpu_custom_call.1} parent=1 // pred_check
      _
    $region27: #{tpu_custom_call.1} parent=1 // pred_check_branch
      %407 = sbr.rel (0) target = $region29
    $region28: #{tpu_custom_call.1} parent=1 // pred_region
      %s409 = ssub.s32 512, 512
      %410 = vsyncadd [#allocation5], %s409
      %s411 = sshll.u32 [#allocation8], 4
      %s412 = int_to_ptr.vmem [resolvable:$true] %s411
      %417 = dma.vmem_to_hbm [thread:$0]  %s412, 512, %s2, [#allocation5], 128, 128, 8
    $region29: #{tpu_custom_call.1} parent=1 // pred_fallthru
      _
    // Predicated region
    $region30: #{tpu_custom_call.1} parent=1 // pred_check
      _
    $region31: #{tpu_custom_call.1} parent=1 // pred_check_branch
      %419 = sbr.rel (0) target = $region33
    $region32: #{tpu_custom_call.1} parent=1 // pred_region
      %420 = dma.done [#allocation5], 512
    $region33: #{tpu_custom_call.1} parent=1 // pred_fallthru
      _
    %421 = vsyncpa [#allocation4], 1
    %422 = vsyncpa [#allocation7], 1
    %423 = vsyncpa [#allocation5], 1

</llo_original>
